<compile_context>
chip_gen: v5e
topology: v5e:2x2
jax: 0.10.0
libtpu: 0.0.40
codegen_flags: <defaults>
</compile_context>

<pallas_src>
import functools
import math

import jax
import jax.numpy as jnp
from jax import lax
from jax.experimental import pallas as pl
from jax.experimental.pallas import tpu as pltpu


_DEFAULT_TOKENS_PER_TILE = 256   # dense (T, d_model) output blocks
_ONE_HOT_MAX_VOCAB = 2048        # above this, one-hot matmul wastes MXU/VMEM


# ---------------------------------------------------------------------------
# Kernels
# ---------------------------------------------------------------------------

def _onehot_embedding_kernel(ids_ref, emb_ref, out_ref, *, scale, vocab):
    """One-hot MXU gather (small vocab, table VMEM-resident).

    ids_ref: VMEM (T, 1) int32 token ids for this tile.
    emb_ref: VMEM (vocab, d_model) resident embedding table.
    out_ref: VMEM (T, d_model) output block.
    """
    t_rows = out_ref.shape[0]
    ids = ids_ref[...]                                         # (T, 1) int32
    iota = lax.broadcasted_iota(jnp.int32, (t_rows, vocab), 1)  # lanes = vocab
    # Fold sqrt(d_model) into the one-hot (free select on VPU), then one dense
    # MXU matmul + one unmasked dense block store.
    one_hot = jnp.where(ids == iota, scale, 0.0).astype(emb_ref.dtype)
    out_ref[...] = jnp.dot(
        one_hot, emb_ref[...], preferred_element_type=jnp.float32
    ).astype(out_ref.dtype)


def _gather_embedding_kernel(ids_ref, emb_ref, out_ref, *, scale,
                             tokens_per_tile):
    """Row-gather from a VMEM-resident table (larger vocab path).

    ids_ref: SMEM (n_pad,) int32 (scalar-prefetch).
    emb_ref: VMEM (vocab, d_model) resident table.
    out_ref: VMEM (T, d_model) output block.
    """
    base = pl.program_id(0) * tokens_per_tile

    def body(t, carry):
        idx = ids_ref[base + t]                       # scalar id from SMEM
        out_ref[pl.ds(t, 1), :] = emb_ref[pl.ds(idx, 1), :]
        return carry

    lax.fori_loop(0, tokens_per_tile, body, 0, unroll=8)
    # Scale hoisted out of the per-row loop: one dense full-vreg multiply.
    out_ref[...] = out_ref[...] * scale


# ---------------------------------------------------------------------------
# Wrapper
# ---------------------------------------------------------------------------

def _vmem_capacity_bytes():
    try:
        return int(pltpu.get_tpu_info().vmem_capacity_bytes)
    except Exception:
        return 64 << 20   # conservative: v7x per-TensorCore VMEM


def embedding_forward(ids, emb_table, scale,
                      *, tokens_per_tile=_DEFAULT_TOKENS_PER_TILE):
    """ids: (B, S) int ids; emb_table: (vocab, d_model) -> (B, S, d_model)."""
    B, S = ids.shape
    vocab, d_model = emb_table.shape
    n = B * S
    itemsize = jnp.dtype(emb_table.dtype).itemsize

    # Tile size: large enough to amortize per-grid-step overhead and give
    # dense stores, but never larger than (8-rounded) n.
    T = max(8, min(int(tokens_per_tile), ((n + 7) // 8) * 8))
    n_tiles = pl.cdiv(n, T)

    # Defensive clamp (PyTorch nn.Embedding would raise on out-of-range ids;
    # we remap them to valid rows instead of faulting).
    flat_ids = jnp.clip(ids.reshape(n).astype(jnp.int32), 0, vocab - 1)

    capacity = _vmem_capacity_bytes()
    table_bytes = vocab * d_model * itemsize
    out_tile_bytes = T * d_model * itemsize
    # Assume the (constant-index) table block may still be double-buffered.
    resident_bytes = 2 * table_bytes
    resident_ok = resident_bytes + 4 * out_tile_bytes + (8 << 20) <= capacity

    out_shape = jax.ShapeDtypeStruct((n, d_model), emb_table.dtype)

    if vocab <= _ONE_HOT_MAX_VOCAB and resident_ok:
        # ---- fast path: scale-folded one-hot MXU matmul ----
        ids_2d = flat_ids.reshape(n, 1)
        onehot_bytes = T * vocab * 4
        needed = resident_bytes + 2 * out_tile_bytes + onehot_bytes + (4 << 20)
        vmem_limit = int(min(max(needed, 32 << 20), capacity - (4 << 20)))

        kernel = functools.partial(
            _onehot_embedding_kernel, scale=float(scale), vocab=vocab)
        out_flat = pl.pallas_call(
            kernel,
            grid_spec=pltpu.PrefetchScalarGridSpec(
                num_scalar_prefetch=0,
                grid=(n_tiles,),
                in_specs=[
                    pl.BlockSpec((T, 1), lambda i: (i, 0)),
                    # Whole table, constant block index -> VMEM-resident.
                    pl.BlockSpec((vocab, d_model), lambda i: (0, 0)),
                ],
                out_specs=pl.BlockSpec((T, d_model), lambda i: (i, 0)),
            ),
            out_shape=out_shape,
            compiler_params=pltpu.CompilerParams(
                dimension_semantics=("parallel",),
                vmem_limit_bytes=vmem_limit,
            ),
        )(ids_2d, emb_table)
        return out_flat.reshape(B, S, d_model)

    if resident_ok:
        # ---- resident-table scalar-gather path (large vocab, fits VMEM) ----
        n_pad = n_tiles * T
        ids_pad = jnp.pad(flat_ids, (0, n_pad - n))   # pad ids only (cheap);
        needed = resident_bytes + 2 * out_tile_bytes + (4 << 20)
        vmem_limit = int(min(max(needed, 32 << 20), capacity - (4 << 20)))

        kernel = functools.partial(
            _gather_embedding_kernel, scale=float(scale), tokens_per_tile=T)
        out_flat = pl.pallas_call(
            kernel,
            grid_spec=pltpu.PrefetchScalarGridSpec(
                num_scalar_prefetch=1,
                grid=(n_tiles,),
                in_specs=[
                    pl.BlockSpec((vocab, d_model), lambda i, ids_s: (0, 0)),
                ],
                out_specs=pl.BlockSpec((T, d_model), lambda i, ids_s: (i, 0)),
            ),
            out_shape=out_shape,
            compiler_params=pltpu.CompilerParams(
                dimension_semantics=("parallel",),
                vmem_limit_bytes=vmem_limit,
            ),
        )(ids_pad, emb_table)
        return out_flat.reshape(B, S, d_model)

    # TODO(synk): huge tables (> per-generation VMEM residency) need a manual
    # memory_space=pl.ANY + multi-outstanding make_async_copy row-gather
    # pipeline; fall back to XLA's gather until then.
    return (jnp.take(emb_table, flat_ids, axis=0) * scale).reshape(B, S, d_model)


# ---------------------------------------------------------------------------
# Demo / correctness check
# ---------------------------------------------------------------------------

if __name__ == "__main__":
    d_model = 128
    scale = math.sqrt(d_model)
    key = jax.random.PRNGKey(0)
    k1, k2, k3, k4 = jax.random.split(key, 4)

    # Small config mirroring config.input_size=64, d_model=128 (one-hot path).
    vocab_small, B, S = 64, 2, 8
    table_small = jax.random.normal(k1, (vocab_small, d_model), dtype=jnp.float32)
    ids_small = jax.random.randint(k2, (B, S), 0, vocab_small, dtype=jnp.int32)
    out_small = jax.block_until_ready(
        embedding_forward(ids_small, table_small, scale))
    ref_small = jnp.take(table_small, ids_small, axis=0) * scale
    assert out_small.shape == (B, S, d_model)
    assert jnp.allclose(out_small, ref_small, atol=1e-4, rtol=1e-4)

    # Larger vocab exercises the resident-table scalar-gather path.
    vocab_big, B2, S2 = 4096, 2, 128
    table_big = jax.random.normal(k3, (vocab_big, d_model), dtype=jnp.float32)
    ids_big = jax.random.randint(k4, (B2, S2), 0, vocab_big, dtype=jnp.int32)
    out_big = jax.block_until_ready(
        embedding_forward(ids_big, table_big, scale))
    ref_big = jnp.take(table_big, ids_big, axis=0) * scale
    assert out_big.shape == (B2, S2, d_model)
    assert jnp.allclose(out_big, ref_big, atol=1e-4, rtol=1e-4)

    print("KERNEL_OK")
</pallas_src>

<mosaic_0001>
module attributes {stable_mosaic.version = 11 : i64} {
  func.func @_onehot_embedding_kernel(%arg0: i32, %arg1: memref<16x1xi32, #tpu.memory_space<vmem>>, %arg2: memref<64x128xf32, #tpu.memory_space<vmem>>, %arg3: memref<16x128xf32, #tpu.memory_space<vmem>>) attributes {dimension_semantics = [#tpu.dimension_semantics<parallel>], iteration_bounds = array<i64: 1>, scalar_prefetch = 0 : i64, scratch_operands = 0 : i64, tpu.core_type = #tpu.core_type<tc>, window_params = [{transform_indices = @transform_0, window_bounds = array<i64: 16, 1>}, {pipeline_mode = #tpu.pipeline_mode<synchronous>, transform_indices = @transform_1, window_bounds = array<i64: 64, 128>}, {transform_indices = @transform_2, window_bounds = array<i64: 16, 128>}]} {
    %c0 = arith.constant 0 : index
    %c0_0 = arith.constant 0 : index
    %0 = vector.load %arg1[%c0, %c0_0] : memref<16x1xi32, #tpu.memory_space<vmem>>, vector<16x1xi32>
    %1 = tpu.iota {dimensions = array<i32: 1>} : vector<16x64xi32>
    %2 = vector.broadcast %0 : vector<16x1xi32> to vector<16x64xi32>
    %3 = arith.cmpi eq, %2, %1 : vector<16x64xi32>
    %cst = arith.constant 11.3137083 : f32
    %cst_1 = arith.constant 0.000000e+00 : f32
    %4 = vector.broadcast %cst : f32 to vector<16x64xf32>
    %5 = vector.broadcast %cst_1 : f32 to vector<16x64xf32>
    %6 = arith.select %3, %4, %5 : vector<16x64xi1>, vector<16x64xf32>
    %c0_2 = arith.constant 0 : index
    %c0_3 = arith.constant 0 : index
    %7 = vector.load %arg2[%c0_2, %c0_3] : memref<64x128xf32, #tpu.memory_space<vmem>>, vector<64x128xf32>
    %cst_4 = arith.constant dense<0.000000e+00> : vector<16x128xf32>
    %8 = tpu.matmul %6, %7, %cst_4 {dimension_numbers = #tpu.dot_dimension_numbers<[1], [0], [0], [1], [0, 0, 1, 1], [], []>} : vector<16x64xf32>, vector<64x128xf32>, vector<16x128xf32> -> vector<16x128xf32>
    %c0_5 = arith.constant 0 : index
    %c0_6 = arith.constant 0 : index
    %9 = vector.load %arg3[%c0_5, %c0_6] : memref<16x128xf32, #tpu.memory_space<vmem>>, vector<16x128xf32>
    tpu.vector_store %arg3[%c0_5, %c0_6], %8 {strides = array<i32>} : memref<16x128xf32, #tpu.memory_space<vmem>>, vector<16x128xf32>,
    return
  }
  func.func @transform_0(%arg0: i32) -> (i32, i32) {
    %c0_i32 = arith.constant 0 : i32
    %c0_i32_0 = arith.constant 0 : i32
    return %arg0, %c0_i32 : i32, i32
  }
  func.func @transform_1(%arg0: i32) -> (i32, i32) {
    %c0_i32 = arith.constant 0 : i32
    %c0_i32_0 = arith.constant 0 : i32
    %c0_i32_1 = arith.constant 0 : i32
    return %c0_i32, %c0_i32_0 : i32, i32
  }
  func.func @transform_2(%arg0: i32) -> (i32, i32) {
    %c0_i32 = arith.constant 0 : i32
    %c0_i32_0 = arith.constant 0 : i32
    return %arg0, %c0_i32 : i32, i32
  }
}

</mosaic_0001>

<llo_original>
// kernel: tpu_custom_call.1
$region0: #{tpu_custom_call.1}
  #allocation0 [shape = 'u32[]', space=smem, size = 0x4, offset = 0x4, fixed_abs, tag = 'smem constant byte address 0x4 - core index']
  #allocation1 [shape = 'u32[72,128]{1,0:T(1,128)}', space=vmem, size = 0x9000, scoped, tag = 'internal scratch']
  %s0 = inlined_call_operand.vmem [shape: s32[16,1], index: 0, kind: input, shape index: {}]
  %s1 = inlined_call_operand.hbm [shape: f32[64,128], index: 1, kind: input, shape index: {}]
  %s2 = inlined_call_operand.hbm [shape: f32[16,128], index: 2, kind: output, shape index: {}]
  %s3 = sld [smem:[#allocation0]]
  $region22: #{tpu_custom_call.1} parent=0
    _
  %s5 = ssub.s32 1, %s3
  %s6 = scalar_select 0, %s5, %s3
  $region1: #{tpu_custom_call.1} parent=0
    #allocation2 [shape = 'u8[32768]{0}', space=vmem, size = 0x8000, scoped, tag = 'input window, operand 1, single buffered']
    #allocation3 [shape = 's32[1]{0}', space=sflag, size = 0x4, scoped, tag = 'scoped memory for tpu_custom_call.1']
    #allocation4 [shape = 's32[1]{0}', space=sflag, size = 0x4, scoped, tag = 'scoped memory for tpu_custom_call.1']
    #allocation5 [shape = 'u8[8192]{0}', space=vmem, size = 0x2000, scoped, tag = 'output window, operand 0, single buffered']
    %7 = vsyncpa [#allocation3], 0
    %8 = vsyncpa [#allocation4], 0
    // Predicated region
    $region2: #{tpu_custom_call.1} parent=1 // pred_check
      _
    $region3: #{tpu_custom_call.1} parent=1 // pred_check_branch
      %10 = sbr.rel (0) target = $region5
    $region4: #{tpu_custom_call.1} parent=1 // pred_region
      _
    $region5: #{tpu_custom_call.1} parent=1 // pred_fallthru
      _
    // Predicated region
    $region6: #{tpu_custom_call.1} parent=1 // pred_check
      _
    $region7: #{tpu_custom_call.1} parent=1 // pred_check_branch
      %12 = sbr.rel (0) target = $region9
    $region8: #{tpu_custom_call.1} parent=1 // pred_region
      %14 = vsyncadd [#allocation3], 0
      %s15 = sshll.u32 %s1, 4
      %s16 = int_to_ptr.hbm [resolvable:$true] %s15
      %s17 = sshll.u32 [#allocation2], 4
      %s18 = int_to_ptr.vmem [resolvable:$true] %s17
      %23 = dma.hbm_to_vmem [thread:$0]  %s16, 1024, %s18, [#allocation3], 128, 128, 8
    $region9: #{tpu_custom_call.1} parent=1 // pred_fallthru
      _
    // Predicated region
    $region10: #{tpu_custom_call.1} parent=1 // pred_check
      _
    $region11: #{tpu_custom_call.1} parent=1 // pred_check_branch
      %25 = sbr.rel (0) target = $region13
    $region12: #{tpu_custom_call.1} parent=1 // pred_region
      %27 = dma.done [#allocation3], 1024
    $region13: #{tpu_custom_call.1} parent=1 // pred_fallthru
      _
    %v28 = vld [vmem:[%s0] sm:$0xff]
    %v29 = vld [vmem:[%s0 + $0x8] sm:$0xff]
    %v30 = vlaneseq
    %v31 = vand.u32 %v30, 127
    %32 = vset.pattern.permute.xlu0 0
    %33 = vperm.xlu0 %32, %v28
    %v34 = vpop.permute.xlu0 %33
    %35 = vset.pattern.permute.xlu0 0
    %36 = vperm.xlu0 %35, %v29
    %v37 = vpop.permute.xlu0 %36
    %vm38 = vcmp.eq.s32.totalorder %v34, %v31
    %vm39 = vcmp.eq.s32.totalorder %v37, %v31
    %v40 = vsel %vm38, 11.313708, 0.0
    %v41 = vsel %vm39, 11.313708, 0.0
    %v42 = vld [vmem:[#allocation2] sm:$0xff]
    %v43 = vld [vmem:[#allocation2 + $0x8] sm:$0xff]
    %v44 = vld [vmem:[#allocation2 + $0x10] sm:$0xff]
    %v45 = vld [vmem:[#allocation2 + $0x18] sm:$0xff]
    %v46 = vld [vmem:[#allocation2 + $0x20] sm:$0xff]
    %v47 = vld [vmem:[#allocation2 + $0x28] sm:$0xff]
    %v48 = vld [vmem:[#allocation2 + $0x30] sm:$0xff]
    %v49 = vld [vmem:[#allocation2 + $0x38] sm:$0xff]
    %vm50 = vcmask 523264
    %v52 = vsel %vm50, %v40, 0
    %v55 = vsel %vm50, %v41, 0
    %57 = vmatpush.msra.mxu0 0.0
    %58 = vmatpush.msra.mxu0 0.0
    %59 = vmatpush.msra.mxu0 0.0
    %60 = vmatpush.msra.mxu0 0.0
    %61 = vmatpush.msra.mxu0 0.0
    %62 = vmatpush.msra.mxu0 0.0
    %63 = vmatpush.msra.mxu0 0.0
    %64 = vmatpush.msra.mxu0 0.0
    %65 = vmatpush.msra.mxu0 %v49
    %66 = vmatpush.msra.mxu0 %v48
    %67 = vmatpush.msra.mxu0 %v47
    %68 = vmatpush.msra.mxu0 %v46
    %69 = vmatpush.msra.mxu0 %v45
    %70 = vmatpush.msra.mxu0 %v44
    %71 = vmatpush.msra.mxu0 %v43
    %72 = vmatpush.msra.mxu0 %v42
    %73 = vmatmul.f32.gmra.mxu0 %v52
    %v74 = vpop.f32.mrf.mxu0
    %v75 = vadd.f32 0.0, %v74
    %76 = vmatmul.f32.gmra.mxu0 %v55
    %v77 = vpop.f32.mrf.mxu0
    %v78 = vadd.f32 0.0, %v77
    %79 = vdwg.mxu0
    %80 = vst [vmem:[#allocation5] sm:$0xff] %v75
    %81 = vst [vmem:[#allocation5 + $0x8] sm:$0xff] %v78
    // Predicated region
    $region14: #{tpu_custom_call.1} parent=1 // pred_check
      _
    $region15: #{tpu_custom_call.1} parent=1 // pred_check_branch
      %83 = sbr.rel (0) target = $region17
    $region16: #{tpu_custom_call.1} parent=1 // pred_region
      %85 = vsyncadd [#allocation4], 0
      %s86 = sshll.u32 [#allocation5], 4
      %s87 = int_to_ptr.vmem [resolvable:$true] %s86
      %s88 = sshll.u32 %s2, 4
      %s89 = int_to_ptr.hbm [resolvable:$true] %s88
      %94 = dma.vmem_to_hbm [thread:$0]  %s87, 256, %s89, [#allocation4], 128, 128, 8
    $region17: #{tpu_custom_call.1} parent=1 // pred_fallthru
      _
    // Predicated region
    $region18: #{tpu_custom_call.1} parent=1 // pred_check
      _
    $region19: #{tpu_custom_call.1} parent=1 // pred_check_branch
      %96 = sbr.rel (0) target = $region21
    $region20: #{tpu_custom_call.1} parent=1 // pred_region
      %98 = dma.done [#allocation4], 256
    $region21: #{tpu_custom_call.1} parent=1 // pred_fallthru
      _
    %99 = vsyncpa [#allocation3], 1
    %100 = vsyncpa [#allocation4], 1

</llo_original>
